<compile_context>
chip_gen: v5e
topology: v5e:2x2
jax: 0.10.0
libtpu: 0.0.40
codegen_flags: <defaults>
</compile_context>

<pallas_src>
import jax
import jax.numpy as jnp
from jax import lax
from jax.experimental import pallas as pl
from jax.experimental.pallas import tpu as pltpu


def _cdiv(a, b):
    return -(-a // b)


def _round_up(a, b):
    return _cdiv(a, b) * b


def _make_kernel(*, tile_rows, n_inner, m2, ragged):
    """Build the sparsity-loss kernel body (all tiling params are static)."""

    def kernel(x_ref, seg_ref, o_ref):
        i = pl.program_id(1)                       # inner (reduction) axis index

        # Per-split resident accumulator: zero at the start of each split's sweep.
        @pl.when(i == 0)
        def _init():
            o_ref[...] = jnp.zeros_like(o_ref)

        x = x_ref[...].astype(jnp.float32)         # (tile_rows, dp)

        if ragged:
            # Out-of-bounds rows of a partial / duplicated block hold unspecified
            # data: zero them *before* squaring so they contribute sqrt(0) = 0.
            c = pl.program_id(0)
            row0 = (c * n_inner + i) * tile_rows   # unclamped on purpose (see header)
            r_iota = lax.broadcasted_iota(jnp.int32, (tile_rows, 1), 0)
            x = jnp.where(row0 + r_iota < m2, x, 0.0)

        s = x * x                                  # (tile_rows, dp)

        # MXU segmented sum: seg_ref is a static (dp, 128) 0/1 matrix placing each
        # segment's sum-of-squares at its segment-start lane (zeros elsewhere).
        sums = jnp.dot(s, seg_ref[...], preferred_element_type=jnp.float32)
        norms = jnp.sqrt(sums)                     # segment norms; dead lanes stay 0

        # One cross-sublane reduce per step, accumulated into the lane-dense block.
        partial = jnp.sum(norms, axis=0, keepdims=True)   # (1, 128)
        o_ref[0:1, :] += partial

    return kernel


def occ_sparsity_loss(density, loss_weight=0.1, *, tile_rows=None,
                      num_core_splits=1, block_bytes=8 * 1024 * 1024,
                      vmem_limit_bytes=48 * 1024 * 1024):
    """JAX/Pallas equivalent of OccSparsityLoss.forward(density)."""
    orig_dtype = density.dtype
    d = int(density.shape[-1])
    m = density.size // d

    # ---- lane-dense repack: fold G consecutive rows into one (up to) 128-lane row ----
    g = 1
    if d <= 128 and (128 % d) == 0:
        cand = 128 // d
        while cand > 1 and (m % cand) != 0:        # partial packing allowed (dp < 128)
            cand //= 2
        g = cand
    dp = g * d
    m2 = m // g

    x = density.reshape(m2, dp)                    # row-major: pure layout plumbing

    # ---- tile sizing: ~block_bytes per block, double-buffered by Pallas ----
    itemsize = density.dtype.itemsize
    row_align = 8 * max(1, 4 // itemsize)          # 8 (f32) / 16 (bf16) / 32 (i8,fp8)
    lanes_padded = _round_up(dp, 128)              # VMEM pads the minor dim to 128 lanes
    if tile_rows is None:
        tile_rows = (block_bytes // (lanes_padded * itemsize)) // row_align * row_align
        tile_rows = max(row_align, tile_rows)
    tile_rows = min(tile_rows, _round_up(m2, row_align))
    tile_rows = max(row_align, (tile_rows // row_align) * row_align)

    n_blocks = _cdiv(m2, tile_rows)
    n_split = max(1, min(int(num_core_splits), n_blocks))   # no wasted duplicated tiles
    n_inner = _cdiv(n_blocks, n_split)
    ragged = n_split * n_inner * tile_rows > m2
    last_block = n_blocks - 1

    # ---- static block-diagonal segment-sum matrix (traced-time constant) ----
    lane = jnp.arange(128, dtype=jnp.int32)[None, :]
    src = jnp.arange(dp, dtype=jnp.int32)[:, None]
    seg_mat = (lane == (src // d) * d).astype(jnp.float32)   # (dp, 128)

    kernel = _make_kernel(tile_rows=tile_rows, n_inner=n_inner, m2=m2, ragged=ragged)

    def x_map(c, i):
        # Clamp so duplicated tail blocks (from the core split) stay in bounds;
        # their rows are fully zero-masked in the kernel (mask uses unclamped index).
        return (jnp.minimum(c * n_inner + i, last_block), 0)

    cost = pl.CostEstimate(
        flops=2 * m2 * dp + 2 * m2 * dp * 128 + m2 * 128,
        transcendentals=m2 * 128,
        bytes_accessed=m2 * dp * itemsize + dp * 128 * 4 + n_split * 8 * 128 * 4,
    )

    partials = pl.pallas_call(
        kernel,
        out_shape=jax.ShapeDtypeStruct((n_split * 8, 128), jnp.float32),
        grid_spec=pltpu.PrefetchScalarGridSpec(
            num_scalar_prefetch=0,
            grid=(n_split, n_inner),
            in_specs=[pl.BlockSpec((tile_rows, dp), x_map),
                      pl.BlockSpec((dp, 128), lambda c, i: (0, 0))],
            out_specs=pl.BlockSpec((8, 128), lambda c, i: (c, 0)),
        ),
        compiler_params=pltpu.CompilerParams(
            dimension_semantics=("parallel", "arbitrary"),
            vmem_limit_bytes=vmem_limit_bytes,
        ),
        cost_estimate=cost,
    )(x, seg_mat)

    total = jnp.sum(partials)                      # non-result lanes/rows are zero
    loss = loss_weight * total / jnp.float32(m)
    return loss.astype(orig_dtype)


if __name__ == "__main__":
    # OccSparsityLoss has no learnable parameters; loss_weight is a constant.
    loss_weight = 0.1
    key = jax.random.PRNGKey(0)

    # density: (batch=2, H=16, W=16, D=32); the norm is over the last dim.
    density = jax.random.uniform(key, (2, 16, 16, 32), dtype=jnp.float32)
    loss = jax.block_until_ready(occ_sparsity_loss(density, loss_weight=loss_weight))
    ref = loss_weight * jnp.mean(jnp.linalg.norm(density, axis=-1))
    assert jnp.allclose(loss, ref, rtol=1e-5, atol=1e-6), (loss, ref)

    # Ragged / non-fully-packable case (odd row count): exercises partial packing
    # fallback (g=1) and the in-kernel tail masking.
    density2 = jax.random.normal(jax.random.PRNGKey(0), (13, 32), dtype=jnp.float32)
    loss2 = jax.block_until_ready(occ_sparsity_loss(density2, loss_weight=loss_weight))
    ref2 = loss_weight * jnp.mean(jnp.linalg.norm(density2, axis=-1))
    assert jnp.allclose(loss2, ref2, rtol=1e-5, atol=1e-6), (loss2, ref2)

    # Multi-block + 2-way split + clamped duplicated tail + partial packing (dp=64).
    density3 = jax.random.normal(jax.random.PRNGKey(1), (3, 50, 32), dtype=jnp.float32)
    loss3 = jax.block_until_ready(
        occ_sparsity_loss(density3, loss_weight=loss_weight,
                          tile_rows=16, num_core_splits=2))
    ref3 = loss_weight * jnp.mean(jnp.linalg.norm(density3, axis=-1))
    assert jnp.allclose(loss3, ref3, rtol=1e-5, atol=1e-6), (loss3, ref3)

    print("KERNEL_OK")
</pallas_src>

<mosaic_0001>
module attributes {stable_mosaic.version = 11 : i64} {
  func.func @kernel(%arg0: i32, %arg1: i32, %arg2: memref<128x128xf32, #tpu.memory_space<vmem>>, %arg3: memref<128x128xf32, #tpu.memory_space<vmem>>, %arg4: memref<8x128xf32, #tpu.memory_space<vmem>>) attributes {dimension_semantics = [#tpu.dimension_semantics<parallel>, #tpu.dimension_semantics<arbitrary>], iteration_bounds = array<i64: 1, 1>, scalar_prefetch = 0 : i64, scratch_operands = 0 : i64, tpu.core_type = #tpu.core_type<tc>, window_params = [{transform_indices = @transform_0, window_bounds = array<i64: 128, 128>}, {pipeline_mode = #tpu.pipeline_mode<synchronous>, transform_indices = @transform_1, window_bounds = array<i64: 128, 128>}, {transform_indices = @transform_2, window_bounds = array<i64: 8, 128>}]} {
    %c0_i32 = arith.constant 0 : i32
    %0 = arith.cmpi eq, %arg1, %c0_i32 : i32
    %1 = arith.extui %0 : i1 to i32
    %c0_i32_0 = arith.constant 0 : i32
    %2 = arith.cmpi ne, %1, %c0_i32_0 : i32
    scf.if %2 {
      %cst_9 = arith.constant 0.000000e+00 : f32
      %13 = vector.broadcast %cst_9 : f32 to vector<8x128xf32>
      %c0_10 = arith.constant 0 : index
      %c0_11 = arith.constant 0 : index
      %14 = vector.load %arg4[%c0_10, %c0_11] : memref<8x128xf32, #tpu.memory_space<vmem>>, vector<8x128xf32>
      tpu.vector_store %arg4[%c0_10, %c0_11], %13 {strides = array<i32>} : memref<8x128xf32, #tpu.memory_space<vmem>>, vector<8x128xf32>,
    } else {
    }
    %c0 = arith.constant 0 : index
    %c0_1 = arith.constant 0 : index
    %3 = vector.load %arg2[%c0, %c0_1] : memref<128x128xf32, #tpu.memory_space<vmem>>, vector<128x128xf32>
    %4 = arith.mulf %3, %3 : vector<128x128xf32>
    %c0_2 = arith.constant 0 : index
    %c0_3 = arith.constant 0 : index
    %5 = vector.load %arg3[%c0_2, %c0_3] : memref<128x128xf32, #tpu.memory_space<vmem>>, vector<128x128xf32>
    %cst = arith.constant dense<0.000000e+00> : vector<128x128xf32>
    %6 = tpu.matmul %4, %5, %cst {dimension_numbers = #tpu.dot_dimension_numbers<[1], [0], [0], [1], [0, 0, 1, 1], [], []>} : vector<128x128xf32>, vector<128x128xf32>, vector<128x128xf32> -> vector<128x128xf32>
    %7 = math.sqrt %6 : vector<128x128xf32>
    %cst_4 = arith.constant dense<0.000000e+00> : vector<128xf32>
    %8 = vector.multi_reduction <add>, %7, %cst_4 [0] : vector<128x128xf32> to vector<128xf32>
    %9 = vector.shape_cast %8 : vector<128xf32> to vector<1x128xf32>
    %c0_5 = arith.constant 0 : index
    %c0_6 = arith.constant 0 : index
    %10 = vector.load %arg4[%c0_5, %c0_6] : memref<8x128xf32, #tpu.memory_space<vmem>>, vector<1x128xf32>
    %11 = arith.addf %10, %9 : vector<1x128xf32>
    %c0_7 = arith.constant 0 : index
    %c0_8 = arith.constant 0 : index
    %12 = vector.load %arg4[%c0_7, %c0_8] : memref<8x128xf32, #tpu.memory_space<vmem>>, vector<1x128xf32>
    tpu.vector_store %arg4[%c0_7, %c0_8], %11 {strides = array<i32>} : memref<8x128xf32, #tpu.memory_space<vmem>>, vector<1x128xf32>,
    return
  }
  func.func @transform_0(%arg0: i32, %arg1: i32) -> (i32, i32) {
    %c1_i32 = arith.constant 1 : i32
    %0 = arith.muli %arg0, %c1_i32 : i32
    %1 = arith.addi %0, %arg1 : i32
    %c0_i32 = arith.constant 0 : i32
    %2 = arith.minsi %1, %c0_i32 : i32
    %c0_i32_0 = arith.constant 0 : i32
    %c0_i32_1 = arith.constant 0 : i32
    return %2, %c0_i32_0 : i32, i32
  }
  func.func @transform_1(%arg0: i32, %arg1: i32) -> (i32, i32) {
    %c0_i32 = arith.constant 0 : i32
    %c0_i32_0 = arith.constant 0 : i32
    %c0_i32_1 = arith.constant 0 : i32
    return %c0_i32, %c0_i32_0 : i32, i32
  }
  func.func @transform_2(%arg0: i32, %arg1: i32) -> (i32, i32) {
    %c0_i32 = arith.constant 0 : i32
    %c0_i32_0 = arith.constant 0 : i32
    return %arg0, %c0_i32 : i32, i32
  }
}

</mosaic_0001>

<llo_original>
// kernel: tpu_custom_call.1
$region0: #{tpu_custom_call.1}
  #allocation0 [shape = 'u32[]', space=smem, size = 0x4, offset = 0x4, fixed_abs, tag = 'smem constant byte address 0x4 - core index']
  #allocation1 [shape = 'u32[72,128]{1,0:T(1,128)}', space=vmem, size = 0x9000, scoped, tag = 'internal scratch']
  %s0 = inlined_call_operand.hbm [shape: f32[128,128], index: 0, kind: input, shape index: {}]
  %s1 = inlined_call_operand.hbm [shape: f32[128,128], index: 1, kind: input, shape index: {}]
  %s2 = inlined_call_operand.hbm [shape: f32[8,128], index: 2, kind: output, shape index: {}]
  %s3 = sld [smem:[#allocation0]]
  $region30: #{tpu_custom_call.1} parent=0
    _
  %s5 = ssub.s32 1, %s3
  %s6 = scalar_select 0, %s5, %s3
  $region1: #{tpu_custom_call.1} parent=0
    #allocation2 [shape = 'u8[65536]{0}', space=vmem, size = 0x10000, scoped, tag = 'input window, operand 0, single buffered']
    #allocation3 [shape = 's32[1]{0}', space=sflag, size = 0x4, scoped, tag = 'scoped memory for tpu_custom_call.1']
    #allocation4 [shape = 's32[1]{0}', space=sflag, size = 0x4, scoped, tag = 'scoped memory for tpu_custom_call.1']
    #allocation5 [shape = 'u8[65536]{0}', space=vmem, size = 0x10000, scoped, tag = 'input window, operand 1, single buffered']
    #allocation6 [shape = 's32[1]{0}', space=sflag, size = 0x4, scoped, tag = 'scoped memory for tpu_custom_call.1']
    #allocation7 [shape = 'u8[4096]{0}', space=vmem, size = 0x1000, scoped, tag = 'output window, operand 0, single buffered']
    %7 = vsyncpa [#allocation3], 0
    %8 = vsyncpa [#allocation6], 0
    %9 = vsyncpa [#allocation4], 0
    // Predicated region
    $region2: #{tpu_custom_call.1} parent=1 // pred_check
      _
    $region3: #{tpu_custom_call.1} parent=1 // pred_check_branch
      %11 = sbr.rel (0) target = $region5
    $region4: #{tpu_custom_call.1} parent=1 // pred_region
      %s12 = sadd.s32 0, 0
      %p13 = scmp.lt.s32.totalorder %s12, 0
      %s14 = scalar_select %p13, %s12, 0
      %s15 = smul.u32 16, %s14
      %17 = vsyncadd [#allocation3], 0
      %s18 = smul.addr %s15, 8
      %s19 = scalar_lea.hbm %s0, %s18
      %s20 = sshll.u32 %s19, 4
      %s21 = int_to_ptr.hbm [resolvable:$true] %s20
      %s22 = sshll.u32 [#allocation2], 4
      %s23 = int_to_ptr.vmem [resolvable:$true] %s22
      %28 = dma.hbm_to_vmem [thread:$0]  %s21, 2048, %s23, [#allocation3], 128, 128, 8
    $region5: #{tpu_custom_call.1} parent=1 // pred_fallthru
      _
    // Predicated region
    $region6: #{tpu_custom_call.1} parent=1 // pred_check
      _
    $region7: #{tpu_custom_call.1} parent=1 // pred_check_branch
      %30 = sbr.rel (0) target = $region9
    $region8: #{tpu_custom_call.1} parent=1 // pred_region
      %32 = vsyncadd [#allocation6], 0
      %s33 = sshll.u32 %s1, 4
      %s34 = int_to_ptr.hbm [resolvable:$true] %s33
      %s35 = sshll.u32 [#allocation5], 4
      %s36 = int_to_ptr.vmem [resolvable:$true] %s35
      %41 = dma.hbm_to_vmem [thread:$0]  %s34, 2048, %s36, [#allocation6], 128, 128, 8
    $region9: #{tpu_custom_call.1} parent=1 // pred_fallthru
      _
    // Predicated region
    $region10: #{tpu_custom_call.1} parent=1 // pred_check
      _
    $region11: #{tpu_custom_call.1} parent=1 // pred_check_branch
      %43 = sbr.rel (0) target = $region13
    $region12: #{tpu_custom_call.1} parent=1 // pred_region
      %45 = dma.done [#allocation3], 2048
    $region13: #{tpu_custom_call.1} parent=1 // pred_fallthru
      _
    // Predicated region
    $region14: #{tpu_custom_call.1} parent=1 // pred_check
      _
    $region15: #{tpu_custom_call.1} parent=1 // pred_check_branch
      %47 = sbr.rel (0) target = $region17
    $region16: #{tpu_custom_call.1} parent=1 // pred_region
      %49 = dma.done [#allocation6], 2048
    $region17: #{tpu_custom_call.1} parent=1 // pred_fallthru
      _
    %s50 = sadd.s32 0, 0
    %p51 = scmp.lt.s32.totalorder %s50, 0
    %s52 = scalar_select %p51, %s50, 0
    %s53 = smul.u32 16, %s52
    %p54 = scmp.eq.s32.totalorder 0, 0
    // Predicated region
    $region18: #{tpu_custom_call.1} parent=1 // pred_check
      %p55 = pneg %p54
    $region19: #{tpu_custom_call.1} parent=1 // pred_check_branch
      %57 = sbr.rel (%p55) target = $region21
    $region20: #{tpu_custom_call.1} parent=1 // pred_region
      %58 = vst [vmem:[#allocation7] sm:$0xff] 0.0
    $region21: #{tpu_custom_call.1} parent=1 // pred_fallthru
      _
    %v59 = vld [vmem:[#allocation2] sm:$0xff]
    %v60 = vld [vmem:[#allocation2 + $0x8] sm:$0xff]
    %v61 = vld [vmem:[#allocation2 + $0x10] sm:$0xff]
    %v62 = vld [vmem:[#allocation2 + $0x18] sm:$0xff]
    %v63 = vld [vmem:[#allocation2 + $0x20] sm:$0xff]
    %v64 = vld [vmem:[#allocation2 + $0x28] sm:$0xff]
    %v65 = vld [vmem:[#allocation2 + $0x30] sm:$0xff]
    %v66 = vld [vmem:[#allocation2 + $0x38] sm:$0xff]
    %v67 = vld [vmem:[#allocation2 + $0x40] sm:$0xff]
    %v68 = vld [vmem:[#allocation2 + $0x48] sm:$0xff]
    %v69 = vld [vmem:[#allocation2 + $0x50] sm:$0xff]
    %v70 = vld [vmem:[#allocation2 + $0x58] sm:$0xff]
    %v71 = vld [vmem:[#allocation2 + $0x60] sm:$0xff]
    %v72 = vld [vmem:[#allocation2 + $0x68] sm:$0xff]
    %v73 = vld [vmem:[#allocation2 + $0x70] sm:$0xff]
    %v74 = vld [vmem:[#allocation2 + $0x78] sm:$0xff]
    %v75 = vmul.f32 %v59, %v59
    %v76 = vmul.f32 %v60, %v60
    %v77 = vmul.f32 %v61, %v61
    %v78 = vmul.f32 %v62, %v62
    %v79 = vmul.f32 %v63, %v63
    %v80 = vmul.f32 %v64, %v64
    %v81 = vmul.f32 %v65, %v65
    %v82 = vmul.f32 %v66, %v66
    %v83 = vmul.f32 %v67, %v67
    %v84 = vmul.f32 %v68, %v68
    %v85 = vmul.f32 %v69, %v69
    %v86 = vmul.f32 %v70, %v70
    %v87 = vmul.f32 %v71, %v71
    %v88 = vmul.f32 %v72, %v72
    %v89 = vmul.f32 %v73, %v73
    %v90 = vmul.f32 %v74, %v74
    %v91 = vld [vmem:[#allocation5] sm:$0xff]
    %v92 = vld [vmem:[#allocation5 + $0x8] sm:$0xff]
    %v93 = vld [vmem:[#allocation5 + $0x10] sm:$0xff]
    %v94 = vld [vmem:[#allocation5 + $0x18] sm:$0xff]
    %v95 = vld [vmem:[#allocation5 + $0x20] sm:$0xff]
    %v96 = vld [vmem:[#allocation5 + $0x28] sm:$0xff]
    %v97 = vld [vmem:[#allocation5 + $0x30] sm:$0xff]
    %v98 = vld [vmem:[#allocation5 + $0x38] sm:$0xff]
    %v99 = vld [vmem:[#allocation5 + $0x40] sm:$0xff]
    %v100 = vld [vmem:[#allocation5 + $0x48] sm:$0xff]
    %v101 = vld [vmem:[#allocation5 + $0x50] sm:$0xff]
    %v102 = vld [vmem:[#allocation5 + $0x58] sm:$0xff]
    %v103 = vld [vmem:[#allocation5 + $0x60] sm:$0xff]
    %v104 = vld [vmem:[#allocation5 + $0x68] sm:$0xff]
    %v105 = vld [vmem:[#allocation5 + $0x70] sm:$0xff]
    %v106 = vld [vmem:[#allocation5 + $0x78] sm:$0xff]
    %107 = vmatpush.msra.mxu0 %v106
    %108 = vmatpush.msra.mxu0 %v105
    %109 = vmatpush.msra.mxu0 %v104
    %110 = vmatpush.msra.mxu0 %v103
    %111 = vmatpush.msra.mxu0 %v102
    %112 = vmatpush.msra.mxu0 %v101
    %113 = vmatpush.msra.mxu0 %v100
    %114 = vmatpush.msra.mxu0 %v99
    %115 = vmatpush.msra.mxu0 %v98
    %116 = vmatpush.msra.mxu0 %v97
    %117 = vmatpush.msra.mxu0 %v96
    %118 = vmatpush.msra.mxu0 %v95
    %119 = vmatpush.msra.mxu0 %v94
    %120 = vmatpush.msra.mxu0 %v93
    %121 = vmatpush.msra.mxu0 %v92
    %122 = vmatpush.msra.mxu0 %v91
    %123 = vmatmul.f32.gmra.mxu0 %v75
    %v124 = vpop.f32.mrf.mxu0
    %v125 = vadd.f32 0.0, %v124
    %126 = vmatmul.f32.gmra.mxu0 %v76
    %v127 = vpop.f32.mrf.mxu0
    %v128 = vadd.f32 0.0, %v127
    %129 = vmatmul.f32.gmra.mxu0 %v77
    %v130 = vpop.f32.mrf.mxu0
    %v131 = vadd.f32 0.0, %v130
    %132 = vmatmul.f32.gmra.mxu0 %v78
    %v133 = vpop.f32.mrf.mxu0
    %v134 = vadd.f32 0.0, %v133
    %135 = vmatmul.f32.gmra.mxu0 %v79
    %v136 = vpop.f32.mrf.mxu0
    %v137 = vadd.f32 0.0, %v136
    %138 = vmatmul.f32.gmra.mxu0 %v80
    %v139 = vpop.f32.mrf.mxu0
    %v140 = vadd.f32 0.0, %v139
    %141 = vmatmul.f32.gmra.mxu0 %v81
    %v142 = vpop.f32.mrf.mxu0
    %v143 = vadd.f32 0.0, %v142
    %144 = vmatmul.f32.gmra.mxu0 %v82
    %v145 = vpop.f32.mrf.mxu0
    %v146 = vadd.f32 0.0, %v145
    %147 = vmatmul.f32.gmra.mxu0 %v83
    %v148 = vpop.f32.mrf.mxu0
    %v149 = vadd.f32 0.0, %v148
    %150 = vmatmul.f32.gmra.mxu0 %v84
    %v151 = vpop.f32.mrf.mxu0
    %v152 = vadd.f32 0.0, %v151
    %153 = vmatmul.f32.gmra.mxu0 %v85
    %v154 = vpop.f32.mrf.mxu0
    %v155 = vadd.f32 0.0, %v154
    %156 = vmatmul.f32.gmra.mxu0 %v86
    %v157 = vpop.f32.mrf.mxu0
    %v158 = vadd.f32 0.0, %v157
    %159 = vmatmul.f32.gmra.mxu0 %v87
    %v160 = vpop.f32.mrf.mxu0
    %v161 = vadd.f32 0.0, %v160
    %162 = vmatmul.f32.gmra.mxu0 %v88
    %v163 = vpop.f32.mrf.mxu0
    %v164 = vadd.f32 0.0, %v163
    %165 = vmatmul.f32.gmra.mxu0 %v89
    %v166 = vpop.f32.mrf.mxu0
    %v167 = vadd.f32 0.0, %v166
    %168 = vmatmul.f32.gmra.mxu0 %v90
    %v169 = vpop.f32.mrf.mxu0
    %v170 = vadd.f32 0.0, %v169
    %171 = vdwg.mxu0
    %v172 = vrsqrt.pop %v125
    %v173 = vmul.f32 %v172, %v125
    %v174 = vmul.f32 %v173, %v172
    %v175 = vmul.f32 0.5, %v174
    %v176 = vsub.f32 1.5, %v175
    %v177 = vmul.f32 %v172, %v176
    %v178 = vmul.f32 %v125, %v177
    %vm179 = vcmp.eq.f32.partialorder %v125, inf
    %v180 = vsel %vm179, %v125, %v178
    %vm181 = vcmp.eq.f32.partialorder %v125, 0.0
    %v182 = vand.u32 %v125, 2147483648
    %v183 = vsel %vm181, %v182, %v180
    %v184 = vrsqrt.pop %v128
    %v185 = vmul.f32 %v184, %v128
    %v186 = vmul.f32 %v185, %v184
    %v187 = vmul.f32 0.5, %v186
    %v188 = vsub.f32 1.5, %v187
    %v189 = vmul.f32 %v184, %v188
    %v190 = vmul.f32 %v128, %v189
    %vm191 = vcmp.eq.f32.partialorder %v128, inf
    %v192 = vsel %vm191, %v128, %v190
    %vm193 = vcmp.eq.f32.partialorder %v128, 0.0
    %v194 = vand.u32 %v128, 2147483648
    %v195 = vsel %vm193, %v194, %v192
    %v196 = vrsqrt.pop %v131
    %v197 = vmul.f32 %v196, %v131
    %v198 = vmul.f32 %v197, %v196
    %v199 = vmul.f32 0.5, %v198
    %v200 = vsub.f32 1.5, %v199
    %v201 = vmul.f32 %v196, %v200
    %v202 = vmul.f32 %v131, %v201
    %vm203 = vcmp.eq.f32.partialorder %v131, inf
    %v204 = vsel %vm203, %v131, %v202
    %vm205 = vcmp.eq.f32.partialorder %v131, 0.0
    %v206 = vand.u32 %v131, 2147483648
    %v207 = vsel %vm205, %v206, %v204
    %v208 = vrsqrt.pop %v134
    %v209 = vmul.f32 %v208, %v134
    %v210 = vmul.f32 %v209, %v208
    %v211 = vmul.f32 0.5, %v210
    %v212 = vsub.f32 1.5, %v211
    %v213 = vmul.f32 %v208, %v212
    %v214 = vmul.f32 %v134, %v213
    %vm215 = vcmp.eq.f32.partialorder %v134, inf
    %v216 = vsel %vm215, %v134, %v214
    %vm217 = vcmp.eq.f32.partialorder %v134, 0.0
    %v218 = vand.u32 %v134, 2147483648
    %v219 = vsel %vm217, %v218, %v216
    %v220 = vrsqrt.pop %v137
    %v221 = vmul.f32 %v220, %v137
    %v222 = vmul.f32 %v221, %v220
    %v223 = vmul.f32 0.5, %v222
    %v224 = vsub.f32 1.5, %v223
    %v225 = vmul.f32 %v220, %v224
    %v226 = vmul.f32 %v137, %v225
    %vm227 = vcmp.eq.f32.partialorder %v137, inf
    %v228 = vsel %vm227, %v137, %v226
    %vm229 = vcmp.eq.f32.partialorder %v137, 0.0
    %v230 = vand.u32 %v137, 2147483648
    %v231 = vsel %vm229, %v230, %v228
    %v232 = vrsqrt.pop %v140
    %v233 = vmul.f32 %v232, %v140
    %v234 = vmul.f32 %v233, %v232
    %v235 = vmul.f32 0.5, %v234
    %v236 = vsub.f32 1.5, %v235
    %v237 = vmul.f32 %v232, %v236
    %v238 = vmul.f32 %v140, %v237
    %vm239 = vcmp.eq.f32.partialorder %v140, inf
    %v240 = vsel %vm239, %v140, %v238
    %vm241 = vcmp.eq.f32.partialorder %v140, 0.0
    %v242 = vand.u32 %v140, 2147483648
    %v243 = vsel %vm241, %v242, %v240
    %v244 = vrsqrt.pop %v143
    %v245 = vmul.f32 %v244, %v143
    %v246 = vmul.f32 %v245, %v244
    %v247 = vmul.f32 0.5, %v246
    %v248 = vsub.f32 1.5, %v247
    %v249 = vmul.f32 %v244, %v248
    %v250 = vmul.f32 %v143, %v249
    %vm251 = vcmp.eq.f32.partialorder %v143, inf
    %v252 = vsel %vm251, %v143, %v250
    %vm253 = vcmp.eq.f32.partialorder %v143, 0.0
    %v254 = vand.u32 %v143, 2147483648
    %v255 = vsel %vm253, %v254, %v252
    %v256 = vrsqrt.pop %v146
    %v257 = vmul.f32 %v256, %v146
    %v258 = vmul.f32 %v257, %v256
    %v259 = vmul.f32 0.5, %v258
    %v260 = vsub.f32 1.5, %v259
    %v261 = vmul.f32 %v256, %v260
    %v262 = vmul.f32 %v146, %v261
    %vm263 = vcmp.eq.f32.partialorder %v146, inf
    %v264 = vsel %vm263, %v146, %v262
    %vm265 = vcmp.eq.f32.partialorder %v146, 0.0
    %v266 = vand.u32 %v146, 2147483648
    %v267 = vsel %vm265, %v266, %v264
    %v268 = vrsqrt.pop %v149
    %v269 = vmul.f32 %v268, %v149
    %v270 = vmul.f32 %v269, %v268
    %v271 = vmul.f32 0.5, %v270
    %v272 = vsub.f32 1.5, %v271
    %v273 = vmul.f32 %v268, %v272
    %v274 = vmul.f32 %v149, %v273
    %vm275 = vcmp.eq.f32.partialorder %v149, inf
    %v276 = vsel %vm275, %v149, %v274
    %vm277 = vcmp.eq.f32.partialorder %v149, 0.0
    %v278 = vand.u32 %v149, 2147483648
    %v279 = vsel %vm277, %v278, %v276
    %v280 = vrsqrt.pop %v152
    %v281 = vmul.f32 %v280, %v152
    %v282 = vmul.f32 %v281, %v280
    %v283 = vmul.f32 0.5, %v282
    %v284 = vsub.f32 1.5, %v283
    %v285 = vmul.f32 %v280, %v284
    %v286 = vmul.f32 %v152, %v285
    %vm287 = vcmp.eq.f32.partialorder %v152, inf
    %v288 = vsel %vm287, %v152, %v286
    %vm289 = vcmp.eq.f32.partialorder %v152, 0.0
    %v290 = vand.u32 %v152, 2147483648
    %v291 = vsel %vm289, %v290, %v288
    %v292 = vrsqrt.pop %v155
    %v293 = vmul.f32 %v292, %v155
    %v294 = vmul.f32 %v293, %v292
    %v295 = vmul.f32 0.5, %v294
    %v296 = vsub.f32 1.5, %v295
    %v297 = vmul.f32 %v292, %v296
    %v298 = vmul.f32 %v155, %v297
    %vm299 = vcmp.eq.f32.partialorder %v155, inf
    %v300 = vsel %vm299, %v155, %v298
    %vm301 = vcmp.eq.f32.partialorder %v155, 0.0
    %v302 = vand.u32 %v155, 2147483648
    %v303 = vsel %vm301, %v302, %v300
    %v304 = vrsqrt.pop %v158
    %v305 = vmul.f32 %v304, %v158
    %v306 = vmul.f32 %v305, %v304
    %v307 = vmul.f32 0.5, %v306
    %v308 = vsub.f32 1.5, %v307
    %v309 = vmul.f32 %v304, %v308
    %v310 = vmul.f32 %v158, %v309
    %vm311 = vcmp.eq.f32.partialorder %v158, inf
    %v312 = vsel %vm311, %v158, %v310
    %vm313 = vcmp.eq.f32.partialorder %v158, 0.0
    %v314 = vand.u32 %v158, 2147483648
    %v315 = vsel %vm313, %v314, %v312
    %v316 = vrsqrt.pop %v161
    %v317 = vmul.f32 %v316, %v161
    %v318 = vmul.f32 %v317, %v316
    %v319 = vmul.f32 0.5, %v318
    %v320 = vsub.f32 1.5, %v319
    %v321 = vmul.f32 %v316, %v320
    %v322 = vmul.f32 %v161, %v321
    %vm323 = vcmp.eq.f32.partialorder %v161, inf
    %v324 = vsel %vm323, %v161, %v322
    %vm325 = vcmp.eq.f32.partialorder %v161, 0.0
    %v326 = vand.u32 %v161, 2147483648
    %v327 = vsel %vm325, %v326, %v324
    %v328 = vrsqrt.pop %v164
    %v329 = vmul.f32 %v328, %v164
    %v330 = vmul.f32 %v329, %v328
    %v331 = vmul.f32 0.5, %v330
    %v332 = vsub.f32 1.5, %v331
    %v333 = vmul.f32 %v328, %v332
    %v334 = vmul.f32 %v164, %v333
    %vm335 = vcmp.eq.f32.partialorder %v164, inf
    %v336 = vsel %vm335, %v164, %v334
    %vm337 = vcmp.eq.f32.partialorder %v164, 0.0
    %v338 = vand.u32 %v164, 2147483648
    %v339 = vsel %vm337, %v338, %v336
    %v340 = vrsqrt.pop %v167
    %v341 = vmul.f32 %v340, %v167
    %v342 = vmul.f32 %v341, %v340
    %v343 = vmul.f32 0.5, %v342
    %v344 = vsub.f32 1.5, %v343
    %v345 = vmul.f32 %v340, %v344
    %v346 = vmul.f32 %v167, %v345
    %vm347 = vcmp.eq.f32.partialorder %v167, inf
    %v348 = vsel %vm347, %v167, %v346
    %vm349 = vcmp.eq.f32.partialorder %v167, 0.0
    %v350 = vand.u32 %v167, 2147483648
    %v351 = vsel %vm349, %v350, %v348
    %v352 = vrsqrt.pop %v170
    %v353 = vmul.f32 %v352, %v170
    %v354 = vmul.f32 %v353, %v352
    %v355 = vmul.f32 0.5, %v354
    %v356 = vsub.f32 1.5, %v355
    %v357 = vmul.f32 %v352, %v356
    %v358 = vmul.f32 %v170, %v357
    %vm359 = vcmp.eq.f32.partialorder %v170, inf
    %v360 = vsel %vm359, %v170, %v358
    %vm361 = vcmp.eq.f32.partialorder %v170, 0.0
    %v362 = vand.u32 %v170, 2147483648
    %v363 = vsel %vm361, %v362, %v360
    %v364 = vadd.f32 %v183, %v195
    %v365 = vadd.f32 %v364, %v207
    %v366 = vadd.f32 %v365, %v219
    %v367 = vadd.f32 %v366, %v231
    %v368 = vadd.f32 %v367, %v243
    %v369 = vadd.f32 %v368, %v255
    %v370 = vadd.f32 %v369, %v267
    %v371 = vadd.f32 %v370, %v279
    %v372 = vadd.f32 %v371, %v291
    %v373 = vadd.f32 %v372, %v303
    %v374 = vadd.f32 %v373, %v315
    %v375 = vadd.f32 %v374, %v327
    %v376 = vadd.f32 %v375, %v339
    %v377 = vadd.f32 %v376, %v351
    %v378 = vadd.f32 %v377, %v363
    %v379 = vrot.slane %v378, 4
    %v380 = vadd.f32 %v378, %v379
    %v381 = vrot.slane %v380, 2
    %v382 = vadd.f32 %v380, %v381
    %v383 = vrot.slane %v382, 1
    %v384 = vadd.f32 %v382, %v383
    %v385 = vld [vmem:[#allocation7] sm:$0x1]
    %v386 = vadd.f32 %v385, %v384
    %387 = vst [vmem:[#allocation7] sm:$0x1] %v386
    // Predicated region
    $region22: #{tpu_custom_call.1} parent=1 // pred_check
      _
    $region23: #{tpu_custom_call.1} parent=1 // pred_check_branch
      %389 = sbr.rel (0) target = $region25
    $region24: #{tpu_custom_call.1} parent=1 // pred_region
      %391 = vsyncadd [#allocation4], 0
      %s393 = sshll.u32 [#allocation7], 4
      %s394 = int_to_ptr.vmem [resolvable:$true] %s393
      %s395 = sshll.u32 %s2, 4
      %s396 = int_to_ptr.hbm [resolvable:$true] %s395
      %398 = dma.vmem_to_hbm [thread:$0]  %s394, 128, %s396, [#allocation4]
    $region25: #{tpu_custom_call.1} parent=1 // pred_fallthru
      _
    // Predicated region
    $region26: #{tpu_custom_call.1} parent=1 // pred_check
      _
    $region27: #{tpu_custom_call.1} parent=1 // pred_check_branch
      %400 = sbr.rel (0) target = $region29
    $region28: #{tpu_custom_call.1} parent=1 // pred_region
      %402 = dma.done [#allocation4], 128
    $region29: #{tpu_custom_call.1} parent=1 // pred_fallthru
      _
    %403 = vsyncpa [#allocation3], 1
    %404 = vsyncpa [#allocation6], 1
    %405 = vsyncpa [#allocation4], 1

</llo_original>
